<compile_context>
chip_gen: v7x
topology: tpu7x:2x2x1
jax: 0.10.0
libtpu: 0.0.40
codegen_flags: <defaults>
</compile_context>

<pallas_src>
import functools

import jax
import jax.numpy as jnp
from jax.experimental import pallas as pl
from jax.experimental.pallas import tpu as pltpu


def _round_up(x, m):
    return (x + m - 1) // m * m


def swem_kernel(idx_ref, emb_ref, w1_ref, b1_ref, w2_ref, b2_ref, out_ref,
                acc_ref, *, seq_len, vocab_tile, compute_dtype):
    # idx_ref: (TB, S)  int32          token ids for this batch tile
    # emb_ref: (TV, Ep) compute_dtype  embedding rows for this vocab tile
    # w1_ref:  (Ep, Hp) compute_dtype  b1_ref: (1, Hp) f32
    # w2_ref:  (Hp, Op) compute_dtype  b2_ref: (1, Op) f32
    # out_ref: (TB, Op) f32
    # acc_ref: (TB, Ep) f32 scratch -- summed embeddings across vocab tiles
    v = pl.program_id(1)

    @pl.when(v == 0)
    def _():
        acc_ref[...] = jnp.zeros_like(acc_ref)

    idx = idx_ref[...]                                            # (TB, S)
    tb = idx.shape[0]
    vocab_ids = v * vocab_tile + jax.lax.broadcasted_iota(
        jnp.int32, (tb, vocab_tile), 1)                           # (TB, TV)

    # counts[b, u] = #{ s : idx[b, s] == v*TV + u }.
    # S is small and static here -> static unroll of one (TB, TV) compare+add
    # per position.  (For very large S, switch to a lax.fori_loop over seq
    # chunks; per-iteration live state stays a single (TB, TV) tile.)
    counts = jnp.zeros((tb, vocab_tile), jnp.float32)
    for s in range(seq_len):
        tok = idx[:, s][:, None]                                  # (TB, 1)
        counts = counts + (tok == vocab_ids).astype(jnp.float32)

    # Gather + sum over seq == counts @ embedding_tile  (runs on the MXU).
    acc_ref[...] += jnp.dot(counts.astype(compute_dtype), emb_ref[...],
                            preferred_element_type=jnp.float32)

    @pl.when(v == pl.num_programs(1) - 1)
    def _():
        mean = acc_ref[...] * (1.0 / seq_len)       # one vmul on the reduced tensor
        h = jnp.dot(mean.astype(compute_dtype), w1_ref[...],
                    preferred_element_type=jnp.float32) + b1_ref[...]
        h = jnp.maximum(h, 0.0)                     # ReLU / bias in f32 (v5e-safe)
        out = jnp.dot(h.astype(compute_dtype), w2_ref[...],
                      preferred_element_type=jnp.float32) + b2_ref[...]
        out_ref[...] = out.astype(out_ref.dtype)


def swem_forward(indices, embedding, w1, b1, w2, b2, *,
                 compute_dtype=jnp.float32, batch_tile=128, vocab_tile=128):
    """SWEM forward pass.

    indices:   (seq_len, batch) int32 token ids (PyTorch pad_sequence layout)
    embedding: (vocab, embed_dim) f32
    w1: (hidden, embed_dim) f32, b1: (hidden,) f32     (PyTorch nn.Linear layout)
    w2: (num_out, hidden) f32,  b2: (num_out,) f32
    returns:   (batch, num_out) f32
    """
    S, B = indices.shape
    V, E = embedding.shape
    H = w1.shape[0]
    O = w2.shape[0]

    # Lane-dense padding: every last / contraction dim -> multiple of 128.
    Ep = _round_up(E, 128)
    Hp = _round_up(H, 128)
    Op = _round_up(O, 128)
    Vp = _round_up(V, vocab_tile)

    # Batch tile: multiple of 8 sublanes, capped at `batch_tile`.
    TB = min(batch_tile, _round_up(B, 8))
    Bp = _round_up(B, TB)

    f32 = jnp.float32
    # Zero-pad once in the wrapper; pre-cast the matmul operands to
    # compute_dtype (bf16 on v6e/v7x halves their DMA bytes, MXU-native).
    emb_p = jnp.zeros((Vp, Ep), f32).at[:V, :E].set(embedding).astype(compute_dtype)
    w1_p = jnp.zeros((Ep, Hp), f32).at[:E, :H].set(w1.T).astype(compute_dtype)
    w2_p = jnp.zeros((Hp, Op), f32).at[:H, :O].set(w2.T).astype(compute_dtype)
    b1_p = jnp.zeros((1, Hp), f32).at[0, :H].set(b1)
    b2_p = jnp.zeros((1, Op), f32).at[0, :O].set(b2)
    # (batch, seq) layout so a batch tile is a contiguous sublane block.
    idx_p = jnp.zeros((Bp, S), jnp.int32).at[:B, :].set(indices.astype(jnp.int32).T)

    grid = (Bp // TB, Vp // vocab_tile)

    kernel = functools.partial(swem_kernel, seq_len=S, vocab_tile=vocab_tile,
                               compute_dtype=compute_dtype)

    out_p = pl.pallas_call(
        kernel,
        out_shape=jax.ShapeDtypeStruct((Bp, Op), jnp.float32),
        grid_spec=pltpu.PrefetchScalarGridSpec(
            num_scalar_prefetch=0,
            grid=grid,
            in_specs=[
                pl.BlockSpec((TB, S), lambda b, v: (b, 0)),           # token ids
                pl.BlockSpec((vocab_tile, Ep), lambda b, v: (v, 0)),  # emb rows
                pl.BlockSpec((Ep, Hp), lambda b, v: (0, 0)),          # w1 (resident)
                pl.BlockSpec((1, Hp), lambda b, v: (0, 0)),           # b1
                pl.BlockSpec((Hp, Op), lambda b, v: (0, 0)),          # w2
                pl.BlockSpec((1, Op), lambda b, v: (0, 0)),           # b2
            ],
            out_specs=pl.BlockSpec((TB, Op), lambda b, v: (b, 0)),
            scratch_shapes=[pltpu.VMEM((TB, Ep), jnp.float32)],
        ),
        compiler_params=pltpu.CompilerParams(
            dimension_semantics=("parallel", "arbitrary"),
            vmem_limit_bytes=32 * 1024 * 1024,   # explicit budget (v7x: 64 MiB phys)
        ),
    )(idx_p, emb_p, w1_p, b1_p, w2_p, b2_p)

    return out_p[:B, :O]


if __name__ == "__main__":
    VOCAB_SIZE = 100
    EMBED_DIM = 32
    HIDDEN_DIM = 64
    NUM_OUTPUT = 8
    SEQ_LEN = 8
    BATCH = 4

    key = jax.random.PRNGKey(0)
    k_emb, k_w1, k_b1, k_w2, k_b2, k_idx = jax.random.split(key, 6)

    # Deterministic synthetic parameters (PyTorch layouts: Linear W is (out, in)).
    embedding = jax.random.normal(k_emb, (VOCAB_SIZE, EMBED_DIM), jnp.float32)
    w1 = jax.random.normal(k_w1, (HIDDEN_DIM, EMBED_DIM), jnp.float32) * 0.1
    b1 = jax.random.normal(k_b1, (HIDDEN_DIM,), jnp.float32) * 0.1
    w2 = jax.random.normal(k_w2, (NUM_OUTPUT, HIDDEN_DIM), jnp.float32) * 0.1
    b2 = jax.random.normal(k_b2, (NUM_OUTPUT,), jnp.float32) * 0.1
    indices = jax.random.randint(k_idx, (SEQ_LEN, BATCH), 0, VOCAB_SIZE,
                                 dtype=jnp.int32)

    # Pure-JAX reference of the PyTorch forward.
    emb_ref = jnp.take(embedding, indices, axis=0)        # (S, B, E)
    mean_ref = jnp.mean(emb_ref, axis=0)                  # (B, E)
    h_ref = jnp.maximum(mean_ref @ w1.T + b1, 0.0)
    ref = h_ref @ w2.T + b2                               # (B, O)

    # f32 path (tight check).
    out_f32 = jax.block_until_ready(
        swem_forward(indices, embedding, w1, b1, w2, b2,
                     compute_dtype=jnp.float32))
    assert out_f32.shape == (BATCH, NUM_OUTPUT)
    assert jnp.allclose(out_f32, ref, atol=1e-4, rtol=1e-4)

    # bf16 MXU-operand path (recommended on v6e/v7x); f32 accumulation.
    out_bf16 = jax.block_until_ready(
        swem_forward(indices, embedding, w1, b1, w2, b2,
                     compute_dtype=jnp.bfloat16))
    assert jnp.allclose(out_bf16, ref, atol=5e-2, rtol=5e-2)

    print("KERNEL_OK")
</pallas_src>

<mosaic_0001>
module attributes {stable_mosaic.version = 11 : i64} {
  func.func @swem_kernel(%arg0: i32, %arg1: i32, %arg2: memref<8x8xi32, #tpu.memory_space<vmem>>, %arg3: memref<128x128xf32, #tpu.memory_space<vmem>>, %arg4: memref<128x128xf32, #tpu.memory_space<vmem>>, %arg5: memref<1x128xf32, #tpu.memory_space<vmem>>, %arg6: memref<128x128xf32, #tpu.memory_space<vmem>>, %arg7: memref<1x128xf32, #tpu.memory_space<vmem>>, %arg8: memref<8x128xf32, #tpu.memory_space<vmem>>, %arg9: memref<8x128xf32, #tpu.memory_space<vmem>>) attributes {dimension_semantics = [#tpu.dimension_semantics<parallel>, #tpu.dimension_semantics<arbitrary>], iteration_bounds = array<i64: 1, 1>, scalar_prefetch = 0 : i64, scratch_operands = 1 : i64, tpu.core_type = #tpu.core_type<tc>, window_params = [{transform_indices = @transform_0, window_bounds = array<i64: 8, 8>}, {transform_indices = @transform_1, window_bounds = array<i64: 128, 128>}, {pipeline_mode = #tpu.pipeline_mode<synchronous>, transform_indices = @transform_2, window_bounds = array<i64: 128, 128>}, {pipeline_mode = #tpu.pipeline_mode<synchronous>, transform_indices = @transform_3, window_bounds = array<i64: 1, 128>}, {pipeline_mode = #tpu.pipeline_mode<synchronous>, transform_indices = @transform_4, window_bounds = array<i64: 128, 128>}, {pipeline_mode = #tpu.pipeline_mode<synchronous>, transform_indices = @transform_5, window_bounds = array<i64: 1, 128>}, {transform_indices = @transform_6, window_bounds = array<i64: 8, 128>}]} {
    %c0_i32 = arith.constant 0 : i32
    %0 = arith.cmpi eq, %arg1, %c0_i32 : i32
    %1 = arith.extui %0 : i1 to i32
    %c0_i32_0 = arith.constant 0 : i32
    %2 = arith.cmpi ne, %1, %c0_i32_0 : i32
    scf.if %2 {
      %cst_11 = arith.constant 0.000000e+00 : f32
      %81 = vector.broadcast %cst_11 : f32 to vector<8x128xf32>
      %c0_12 = arith.constant 0 : index
      %c0_13 = arith.constant 0 : index
      %82 = vector.load %arg9[%c0_12, %c0_13] : memref<8x128xf32, #tpu.memory_space<vmem>>, vector<8x128xf32>
      tpu.vector_store %arg9[%c0_12, %c0_13], %81 {strides = array<i32>} : memref<8x128xf32, #tpu.memory_space<vmem>>, vector<8x128xf32>,
    } else {
    }
    %c0 = arith.constant 0 : index
    %c0_1 = arith.constant 0 : index
    %3 = vector.load %arg2[%c0, %c0_1] : memref<8x8xi32, #tpu.memory_space<vmem>>, vector<8x8xi32>
    %c128_i32 = arith.constant 128 : i32
    %4 = arith.muli %arg1, %c128_i32 : i32
    %5 = tpu.iota {dimensions = array<i32: 1>} : vector<8x128xi32>
    %6 = vector.broadcast %4 : i32 to vector<8x128xi32>
    %7 = arith.addi %6, %5 : vector<8x128xi32>
    %cst = arith.constant 0.000000e+00 : f32
    %8 = vector.broadcast %cst : f32 to vector<8x128xf32>
    %9 = vector.extract_strided_slice %3 {offsets = [0, 0], sizes = [8, 1], strides = [1, 1]} : vector<8x8xi32> to vector<8x1xi32>
    %10 = vector.shape_cast %9 : vector<8x1xi32> to vector<8xi32>
    %11 = vector.shape_cast %10 : vector<8xi32> to vector<8x1xi32>
    %12 = vector.broadcast %11 : vector<8x1xi32> to vector<8x128xi32>
    %13 = arith.cmpi eq, %12, %7 : vector<8x128xi32>
    %14 = arith.extui %13 : vector<8x128xi1> to vector<8x128xi32>
    %15 = arith.sitofp %14 : vector<8x128xi32> to vector<8x128xf32>
    %16 = arith.addf %8, %15 : vector<8x128xf32>
    %17 = vector.extract_strided_slice %3 {offsets = [0, 1], sizes = [8, 1], strides = [1, 1]} : vector<8x8xi32> to vector<8x1xi32>
    %18 = vector.shape_cast %17 : vector<8x1xi32> to vector<8xi32>
    %19 = vector.shape_cast %18 : vector<8xi32> to vector<8x1xi32>
    %20 = vector.broadcast %19 : vector<8x1xi32> to vector<8x128xi32>
    %21 = arith.cmpi eq, %20, %7 : vector<8x128xi32>
    %22 = arith.extui %21 : vector<8x128xi1> to vector<8x128xi32>
    %23 = arith.sitofp %22 : vector<8x128xi32> to vector<8x128xf32>
    %24 = arith.addf %16, %23 : vector<8x128xf32>
    %25 = vector.extract_strided_slice %3 {offsets = [0, 2], sizes = [8, 1], strides = [1, 1]} : vector<8x8xi32> to vector<8x1xi32>
    %26 = vector.shape_cast %25 : vector<8x1xi32> to vector<8xi32>
    %27 = vector.shape_cast %26 : vector<8xi32> to vector<8x1xi32>
    %28 = vector.broadcast %27 : vector<8x1xi32> to vector<8x128xi32>
    %29 = arith.cmpi eq, %28, %7 : vector<8x128xi32>
    %30 = arith.extui %29 : vector<8x128xi1> to vector<8x128xi32>
    %31 = arith.sitofp %30 : vector<8x128xi32> to vector<8x128xf32>
    %32 = arith.addf %24, %31 : vector<8x128xf32>
    %33 = vector.extract_strided_slice %3 {offsets = [0, 3], sizes = [8, 1], strides = [1, 1]} : vector<8x8xi32> to vector<8x1xi32>
    %34 = vector.shape_cast %33 : vector<8x1xi32> to vector<8xi32>
    %35 = vector.shape_cast %34 : vector<8xi32> to vector<8x1xi32>
    %36 = vector.broadcast %35 : vector<8x1xi32> to vector<8x128xi32>
    %37 = arith.cmpi eq, %36, %7 : vector<8x128xi32>
    %38 = arith.extui %37 : vector<8x128xi1> to vector<8x128xi32>
    %39 = arith.sitofp %38 : vector<8x128xi32> to vector<8x128xf32>
    %40 = arith.addf %32, %39 : vector<8x128xf32>
    %41 = vector.extract_strided_slice %3 {offsets = [0, 4], sizes = [8, 1], strides = [1, 1]} : vector<8x8xi32> to vector<8x1xi32>
    %42 = vector.shape_cast %41 : vector<8x1xi32> to vector<8xi32>
    %43 = vector.shape_cast %42 : vector<8xi32> to vector<8x1xi32>
    %44 = vector.broadcast %43 : vector<8x1xi32> to vector<8x128xi32>
    %45 = arith.cmpi eq, %44, %7 : vector<8x128xi32>
    %46 = arith.extui %45 : vector<8x128xi1> to vector<8x128xi32>
    %47 = arith.sitofp %46 : vector<8x128xi32> to vector<8x128xf32>
    %48 = arith.addf %40, %47 : vector<8x128xf32>
    %49 = vector.extract_strided_slice %3 {offsets = [0, 5], sizes = [8, 1], strides = [1, 1]} : vector<8x8xi32> to vector<8x1xi32>
    %50 = vector.shape_cast %49 : vector<8x1xi32> to vector<8xi32>
    %51 = vector.shape_cast %50 : vector<8xi32> to vector<8x1xi32>
    %52 = vector.broadcast %51 : vector<8x1xi32> to vector<8x128xi32>
    %53 = arith.cmpi eq, %52, %7 : vector<8x128xi32>
    %54 = arith.extui %53 : vector<8x128xi1> to vector<8x128xi32>
    %55 = arith.sitofp %54 : vector<8x128xi32> to vector<8x128xf32>
    %56 = arith.addf %48, %55 : vector<8x128xf32>
    %57 = vector.extract_strided_slice %3 {offsets = [0, 6], sizes = [8, 1], strides = [1, 1]} : vector<8x8xi32> to vector<8x1xi32>
    %58 = vector.shape_cast %57 : vector<8x1xi32> to vector<8xi32>
    %59 = vector.shape_cast %58 : vector<8xi32> to vector<8x1xi32>
    %60 = vector.broadcast %59 : vector<8x1xi32> to vector<8x128xi32>
    %61 = arith.cmpi eq, %60, %7 : vector<8x128xi32>
    %62 = arith.extui %61 : vector<8x128xi1> to vector<8x128xi32>
    %63 = arith.sitofp %62 : vector<8x128xi32> to vector<8x128xf32>
    %64 = arith.addf %56, %63 : vector<8x128xf32>
    %65 = vector.extract_strided_slice %3 {offsets = [0, 7], sizes = [8, 1], strides = [1, 1]} : vector<8x8xi32> to vector<8x1xi32>
    %66 = vector.shape_cast %65 : vector<8x1xi32> to vector<8xi32>
    %67 = vector.shape_cast %66 : vector<8xi32> to vector<8x1xi32>
    %68 = vector.broadcast %67 : vector<8x1xi32> to vector<8x128xi32>
    %69 = arith.cmpi eq, %68, %7 : vector<8x128xi32>
    %70 = arith.extui %69 : vector<8x128xi1> to vector<8x128xi32>
    %71 = arith.sitofp %70 : vector<8x128xi32> to vector<8x128xf32>
    %72 = arith.addf %64, %71 : vector<8x128xf32>
    %c0_2 = arith.constant 0 : index
    %c0_3 = arith.constant 0 : index
    %73 = vector.load %arg9[%c0_2, %c0_3] : memref<8x128xf32, #tpu.memory_space<vmem>>, vector<8x128xf32>
    %c0_4 = arith.constant 0 : index
    %c0_5 = arith.constant 0 : index
    %74 = vector.load %arg3[%c0_4, %c0_5] : memref<128x128xf32, #tpu.memory_space<vmem>>, vector<128x128xf32>
    %cst_6 = arith.constant dense<0.000000e+00> : vector<8x128xf32>
    %75 = tpu.matmul %72, %74, %cst_6 {dimension_numbers = #tpu.dot_dimension_numbers<[1], [0], [0], [1], [0, 0, 1, 1], [], []>} : vector<8x128xf32>, vector<128x128xf32>, vector<8x128xf32> -> vector<8x128xf32>
    %76 = arith.addf %73, %75 : vector<8x128xf32>
    %c0_7 = arith.constant 0 : index
    %c0_8 = arith.constant 0 : index
    %77 = vector.load %arg9[%c0_7, %c0_8] : memref<8x128xf32, #tpu.memory_space<vmem>>, vector<8x128xf32>
    tpu.vector_store %arg9[%c0_7, %c0_8], %76 {strides = array<i32>} : memref<8x128xf32, #tpu.memory_space<vmem>>, vector<8x128xf32>,
    %c0_i32_9 = arith.constant 0 : i32
    %78 = arith.cmpi eq, %arg1, %c0_i32_9 : i32
    %79 = arith.extui %78 : i1 to i32
    %c0_i32_10 = arith.constant 0 : i32
    %80 = arith.cmpi ne, %79, %c0_i32_10 : i32
    scf.if %80 {
      %c0_11 = arith.constant 0 : index
      %c0_12 = arith.constant 0 : index
      %81 = vector.load %arg9[%c0_11, %c0_12] : memref<8x128xf32, #tpu.memory_space<vmem>>, vector<8x128xf32>
      %cst_13 = arith.constant 1.250000e-01 : f32
      %82 = vector.broadcast %cst_13 : f32 to vector<8x128xf32>
      %83 = arith.mulf %81, %82 : vector<8x128xf32>
      %c0_14 = arith.constant 0 : index
      %c0_15 = arith.constant 0 : index
      %84 = vector.load %arg4[%c0_14, %c0_15] : memref<128x128xf32, #tpu.memory_space<vmem>>, vector<128x128xf32>
      %cst_16 = arith.constant dense<0.000000e+00> : vector<8x128xf32>
      %85 = tpu.matmul %83, %84, %cst_16 {dimension_numbers = #tpu.dot_dimension_numbers<[1], [0], [0], [1], [0, 0, 1, 1], [], []>} : vector<8x128xf32>, vector<128x128xf32>, vector<8x128xf32> -> vector<8x128xf32>
      %c0_17 = arith.constant 0 : index
      %c0_18 = arith.constant 0 : index
      %86 = vector.load %arg5[%c0_17, %c0_18] : memref<1x128xf32, #tpu.memory_space<vmem>>, vector<1x128xf32>
      %87 = vector.broadcast %86 : vector<1x128xf32> to vector<8x128xf32>
      %88 = arith.addf %85, %87 : vector<8x128xf32>
      %cst_19 = arith.constant 0.000000e+00 : f32
      %89 = vector.broadcast %cst_19 : f32 to vector<8x128xf32>
      %90 = arith.maximumf %88, %89 : vector<8x128xf32>
      %c0_20 = arith.constant 0 : index
      %c0_21 = arith.constant 0 : index
      %91 = vector.load %arg6[%c0_20, %c0_21] : memref<128x128xf32, #tpu.memory_space<vmem>>, vector<128x128xf32>
      %cst_22 = arith.constant dense<0.000000e+00> : vector<8x128xf32>
      %92 = tpu.matmul %90, %91, %cst_22 {dimension_numbers = #tpu.dot_dimension_numbers<[1], [0], [0], [1], [0, 0, 1, 1], [], []>} : vector<8x128xf32>, vector<128x128xf32>, vector<8x128xf32> -> vector<8x128xf32>
      %c0_23 = arith.constant 0 : index
      %c0_24 = arith.constant 0 : index
      %93 = vector.load %arg7[%c0_23, %c0_24] : memref<1x128xf32, #tpu.memory_space<vmem>>, vector<1x128xf32>
      %94 = vector.broadcast %93 : vector<1x128xf32> to vector<8x128xf32>
      %95 = arith.addf %92, %94 : vector<8x128xf32>
      %c0_25 = arith.constant 0 : index
      %c0_26 = arith.constant 0 : index
      %96 = vector.load %arg8[%c0_25, %c0_26] : memref<8x128xf32, #tpu.memory_space<vmem>>, vector<8x128xf32>
      tpu.vector_store %arg8[%c0_25, %c0_26], %95 {strides = array<i32>} : memref<8x128xf32, #tpu.memory_space<vmem>>, vector<8x128xf32>,
    } else {
    }
    return
  }
  func.func @transform_0(%arg0: i32, %arg1: i32) -> (i32, i32) {
    %c0_i32 = arith.constant 0 : i32
    %c0_i32_0 = arith.constant 0 : i32
    return %arg0, %c0_i32 : i32, i32
  }
  func.func @transform_1(%arg0: i32, %arg1: i32) -> (i32, i32) {
    %c0_i32 = arith.constant 0 : i32
    %c0_i32_0 = arith.constant 0 : i32
    return %arg1, %c0_i32 : i32, i32
  }
  func.func @transform_2(%arg0: i32, %arg1: i32) -> (i32, i32) {
    %c0_i32 = arith.constant 0 : i32
    %c0_i32_0 = arith.constant 0 : i32
    %c0_i32_1 = arith.constant 0 : i32
    return %c0_i32, %c0_i32_0 : i32, i32
  }
  func.func @transform_3(%arg0: i32, %arg1: i32) -> (i32, i32) {
    %c0_i32 = arith.constant 0 : i32
    %c0_i32_0 = arith.constant 0 : i32
    %c0_i32_1 = arith.constant 0 : i32
    return %c0_i32, %c0_i32_0 : i32, i32
  }
  func.func @transform_4(%arg0: i32, %arg1: i32) -> (i32, i32) {
    %c0_i32 = arith.constant 0 : i32
    %c0_i32_0 = arith.constant 0 : i32
    %c0_i32_1 = arith.constant 0 : i32
    return %c0_i32, %c0_i32_0 : i32, i32
  }
  func.func @transform_5(%arg0: i32, %arg1: i32) -> (i32, i32) {
    %c0_i32 = arith.constant 0 : i32
    %c0_i32_0 = arith.constant 0 : i32
    %c0_i32_1 = arith.constant 0 : i32
    return %c0_i32, %c0_i32_0 : i32, i32
  }
  func.func @transform_6(%arg0: i32, %arg1: i32) -> (i32, i32) {
    %c0_i32 = arith.constant 0 : i32
    %c0_i32_0 = arith.constant 0 : i32
    return %arg0, %c0_i32 : i32, i32
  }
}

</mosaic_0001>

<llo_original>
// kernel: tpu_custom_call.1
$region0: #{tpu_custom_call.1}
  #allocation0 [shape = 'u32[]', space=smem, size = 0x4, offset = 0x4, fixed_abs, tag = 'smem constant byte address 0x4 - core index']
  #allocation1 [shape = 'u32[144,128]{1,0:T(1,128)}', space=vmem, size = 0x12000, scoped, tag = 'internal scratch']
  #allocation2 [shape = 'f32[8,128]{1,0:T(8,128)}', space=vmem, size = 0x1000, scoped, tag = 'scratch operand']
  %s0 = inlined_call_operand.hbm [shape: s32[8,8], index: 0, kind: input, shape index: {}]
  %s1 = inlined_call_operand.hbm [shape: f32[128,128], index: 1, kind: input, shape index: {}]
  %s2 = inlined_call_operand.hbm [shape: f32[128,128], index: 2, kind: input, shape index: {}]
  %s3 = inlined_call_operand.vmem [shape: f32[1,128], index: 3, kind: input, shape index: {}]
  %s4 = inlined_call_operand.hbm [shape: f32[128,128], index: 4, kind: input, shape index: {}]
  %s5 = inlined_call_operand.vmem [shape: f32[1,128], index: 5, kind: input, shape index: {}]
  %s6 = inlined_call_operand.hbm [shape: f32[8,128], index: 6, kind: output, shape index: {}]
  %s7 = sld [smem:[#allocation0]]
  $region58: #{tpu_custom_call.1} parent=0
    _
  %s9 = ssub.s32 1, %s7
  %s10 = scalar_select 0, %s9, %s7
  $region1: #{tpu_custom_call.1} parent=0
    #allocation3 [shape = 'u8[4096]{0}', space=vmem, size = 0x1000, scoped, tag = 'input window, operand 0, single buffered']
    #allocation4 [shape = 's32[1]{0}', space=sflag, size = 0x4, scoped, tag = 'scoped memory for tpu_custom_call.1']
    #allocation5 [shape = 's32[1]{0}', space=sflag, size = 0x4, scoped, tag = 'scoped memory for tpu_custom_call.1']
    #allocation6 [shape = 'u8[65536]{0}', space=vmem, size = 0x10000, scoped, tag = 'input window, operand 1, single buffered']
    #allocation7 [shape = 's32[1]{0}', space=sflag, size = 0x4, scoped, tag = 'scoped memory for tpu_custom_call.1']
    #allocation8 [shape = 'u8[65536]{0}', space=vmem, size = 0x10000, scoped, tag = 'input window, operand 2, single buffered']
    #allocation9 [shape = 'u8[65536]{0}', space=vmem, size = 0x10000, scoped, tag = 'input window, operand 4, single buffered']
    #allocation10 [shape = 's32[1]{0}', space=sflag, size = 0x4, scoped, tag = 'scoped memory for tpu_custom_call.1']
    #allocation11 [shape = 'u8[4096]{0}', space=vmem, size = 0x1000, scoped, tag = 'output window, operand 0, single buffered']
    %11 = vsyncpa [#allocation4], 0
    %12 = vsyncpa [#allocation7], 0
    %13 = vsyncpa [#allocation10], 0
    %14 = vsyncpa [#allocation5], 0
    // Predicated region
    $region2: #{tpu_custom_call.1} parent=1 // pred_check
      _
    $region3: #{tpu_custom_call.1} parent=1 // pred_check_branch
      %16 = sbr.rel (0) target = $region5
    $region4: #{tpu_custom_call.1} parent=1 // pred_region
      %s18 = ssub.s32 128, 128
      %19 = vsyncadd [#allocation4], %s18
      %s21 = sshll.u32 [#allocation3], 4
      %s22 = int_to_ptr.vmem [resolvable:$true] %s21
      %24 = dma.hbm_to_vmem [thread:$0]  %s0, 128, %s22, [#allocation4]
    $region5: #{tpu_custom_call.1} parent=1 // pred_fallthru
      _
    // Predicated region
    $region6: #{tpu_custom_call.1} parent=1 // pred_check
      _
    $region7: #{tpu_custom_call.1} parent=1 // pred_check_branch
      %26 = sbr.rel (0) target = $region9
    $region8: #{tpu_custom_call.1} parent=1 // pred_region
      %s28 = ssub.s32 2048, 2048
      %29 = vsyncadd [#allocation7], %s28
      %s30 = sshll.u32 [#allocation6], 4
      %s31 = int_to_ptr.vmem [resolvable:$true] %s30
      %36 = dma.hbm_to_vmem [thread:$0]  %s1, 2048, %s31, [#allocation7], 128, 128, 8
    $region9: #{tpu_custom_call.1} parent=1 // pred_fallthru
      _
    // Predicated region
    $region10: #{tpu_custom_call.1} parent=1 // pred_check
      _
    $region11: #{tpu_custom_call.1} parent=1 // pred_check_branch
      %38 = sbr.rel (0) target = $region13
    $region12: #{tpu_custom_call.1} parent=1 // pred_region
      %s40 = ssub.s32 2048, 2048
      %41 = vsyncadd [#allocation7], %s40
      %s42 = sshll.u32 [#allocation8], 4
      %s43 = int_to_ptr.vmem [resolvable:$true] %s42
      %48 = dma.hbm_to_vmem [thread:$0]  %s2, 2048, %s43, [#allocation7], 128, 128, 8
    $region13: #{tpu_custom_call.1} parent=1 // pred_fallthru
      _
    // Predicated region
    $region14: #{tpu_custom_call.1} parent=1 // pred_check
      _
    $region15: #{tpu_custom_call.1} parent=1 // pred_check_branch
      %50 = sbr.rel (0) target = $region17
    $region16: #{tpu_custom_call.1} parent=1 // pred_region
      _
    $region17: #{tpu_custom_call.1} parent=1 // pred_fallthru
      _
    // Predicated region
    $region18: #{tpu_custom_call.1} parent=1 // pred_check
      _
    $region19: #{tpu_custom_call.1} parent=1 // pred_check_branch
      %52 = sbr.rel (0) target = $region21
    $region20: #{tpu_custom_call.1} parent=1 // pred_region
      %s54 = ssub.s32 2048, 2048
      %55 = vsyncadd [#allocation10], %s54
      %s56 = sshll.u32 [#allocation9], 4
      %s57 = int_to_ptr.vmem [resolvable:$true] %s56
      %62 = dma.hbm_to_vmem [thread:$0]  %s4, 2048, %s57, [#allocation10], 128, 128, 8
    $region21: #{tpu_custom_call.1} parent=1 // pred_fallthru
      _
    // Predicated region
    $region22: #{tpu_custom_call.1} parent=1 // pred_check
      _
    $region23: #{tpu_custom_call.1} parent=1 // pred_check_branch
      %64 = sbr.rel (0) target = $region25
    $region24: #{tpu_custom_call.1} parent=1 // pred_region
      _
    $region25: #{tpu_custom_call.1} parent=1 // pred_fallthru
      _
    // Predicated region
    $region26: #{tpu_custom_call.1} parent=1 // pred_check
      _
    $region27: #{tpu_custom_call.1} parent=1 // pred_check_branch
      %66 = sbr.rel (0) target = $region29
    $region28: #{tpu_custom_call.1} parent=1 // pred_region
      %67 = dma.done [#allocation4], 128
    $region29: #{tpu_custom_call.1} parent=1 // pred_fallthru
      _
    // Predicated region
    $region30: #{tpu_custom_call.1} parent=1 // pred_check
      _
    $region31: #{tpu_custom_call.1} parent=1 // pred_check_branch
      %69 = sbr.rel (0) target = $region33
    $region32: #{tpu_custom_call.1} parent=1 // pred_region
      %70 = dma.done [#allocation7], 2048
    $region33: #{tpu_custom_call.1} parent=1 // pred_fallthru
      _
    // Predicated region
    $region34: #{tpu_custom_call.1} parent=1 // pred_check
      _
    $region35: #{tpu_custom_call.1} parent=1 // pred_check_branch
      %72 = sbr.rel (0) target = $region37
    $region36: #{tpu_custom_call.1} parent=1 // pred_region
      %73 = dma.done [#allocation7], 2048
    $region37: #{tpu_custom_call.1} parent=1 // pred_fallthru
      _
    // Predicated region
    $region38: #{tpu_custom_call.1} parent=1 // pred_check
      _
    $region39: #{tpu_custom_call.1} parent=1 // pred_check_branch
      %75 = sbr.rel (0) target = $region41
    $region40: #{tpu_custom_call.1} parent=1 // pred_region
      %76 = dma.done [#allocation10], 2048
    $region41: #{tpu_custom_call.1} parent=1 // pred_fallthru
      _
    %p77 = scmp.eq.s32.totalorder 0, 0
    // Predicated region
    $region42: #{tpu_custom_call.1} parent=1 // pred_check
      %p78 = pneg %p77
    $region43: #{tpu_custom_call.1} parent=1 // pred_check_branch
      %80 = sbr.rel (%p78) target = $region45
    $region44: #{tpu_custom_call.1} parent=1 // pred_region
      %81 = vst [vmem:[#allocation2] sm:$0xff] 0.0
    $region45: #{tpu_custom_call.1} parent=1 // pred_fallthru
      _
    %v82 = vld [vmem:[#allocation3] sm:$0xff]
    %s83 = smul.u32 0, 128
    %v84 = vlaneseq
    %v85 = vand.u32 %v84, 127
    %v86 = vstv %s83
    %v87 = vadd.s32 %v86, %v85
    %88 = vset.pattern.permute.xlu0 0
    %89 = vperm.xlu0 %88, %v82
    %v90 = vpop.permute.xlu0 %89
    %vm91 = vcmp.eq.s32.totalorder %v90, %v87
    %v92 = vsel %vm91, 1, 0
    %v93 = vcvt.s32.f32 %v92
    %v94 = vadd.f32 %v93, 0.0
    %95 = vset.pattern.permute.xlu0 1
    %96 = vperm.xlu0 %95, %v82
    %v97 = vpop.permute.xlu0 %96
    %vm98 = vcmp.eq.s32.totalorder %v97, %v87
    %v99 = vsel %vm98, 1, 0
    %v100 = vcvt.s32.f32 %v99
    %v101 = vadd.f32 %v94, %v100
    %102 = vset.pattern.permute.xlu0 2
    %103 = vperm.xlu0 %102, %v82
    %v104 = vpop.permute.xlu0 %103
    %vm105 = vcmp.eq.s32.totalorder %v104, %v87
    %v106 = vsel %vm105, 1, 0
    %v107 = vcvt.s32.f32 %v106
    %v108 = vadd.f32 %v101, %v107
    %109 = vset.pattern.permute.xlu0 3
    %110 = vperm.xlu0 %109, %v82
    %v111 = vpop.permute.xlu0 %110
    %vm112 = vcmp.eq.s32.totalorder %v111, %v87
    %v113 = vsel %vm112, 1, 0
    %v114 = vcvt.s32.f32 %v113
    %v115 = vadd.f32 %v108, %v114
    %116 = vset.pattern.permute.xlu0 4
    %117 = vperm.xlu0 %116, %v82
    %v118 = vpop.permute.xlu0 %117
    %vm119 = vcmp.eq.s32.totalorder %v118, %v87
    %v120 = vsel %vm119, 1, 0
    %v121 = vcvt.s32.f32 %v120
    %v122 = vadd.f32 %v115, %v121
    %123 = vset.pattern.permute.xlu0 5
    %124 = vperm.xlu0 %123, %v82
    %v125 = vpop.permute.xlu0 %124
    %vm126 = vcmp.eq.s32.totalorder %v125, %v87
    %v127 = vsel %vm126, 1, 0
    %v128 = vcvt.s32.f32 %v127
    %v129 = vadd.f32 %v122, %v128
    %130 = vset.pattern.permute.xlu0 6
    %131 = vperm.xlu0 %130, %v82
    %v132 = vpop.permute.xlu0 %131
    %vm133 = vcmp.eq.s32.totalorder %v132, %v87
    %v134 = vsel %vm133, 1, 0
    %v135 = vcvt.s32.f32 %v134
    %v136 = vadd.f32 %v129, %v135
    %137 = vset.pattern.permute.xlu0 7
    %138 = vperm.xlu0 %137, %v82
    %v139 = vpop.permute.xlu0 %138
    %vm140 = vcmp.eq.s32.totalorder %v139, %v87
    %v141 = vsel %vm140, 1, 0
    %v142 = vcvt.s32.f32 %v141
    %v143 = vadd.f32 %v136, %v142
    %v144 = vld [vmem:[#allocation2] sm:$0xff]
    %v145 = vld [vmem:[#allocation6] sm:$0xff]
    %v146 = vld [vmem:[#allocation6 + $0x8] sm:$0xff]
    %v147 = vld [vmem:[#allocation6 + $0x10] sm:$0xff]
    %v148 = vld [vmem:[#allocation6 + $0x18] sm:$0xff]
    %v149 = vld [vmem:[#allocation6 + $0x20] sm:$0xff]
    %v150 = vld [vmem:[#allocation6 + $0x28] sm:$0xff]
    %v151 = vld [vmem:[#allocation6 + $0x30] sm:$0xff]
    %v152 = vld [vmem:[#allocation6 + $0x38] sm:$0xff]
    %v153 = vld [vmem:[#allocation6 + $0x40] sm:$0xff]
    %v154 = vld [vmem:[#allocation6 + $0x48] sm:$0xff]
    %v155 = vld [vmem:[#allocation6 + $0x50] sm:$0xff]
    %v156 = vld [vmem:[#allocation6 + $0x58] sm:$0xff]
    %v157 = vld [vmem:[#allocation6 + $0x60] sm:$0xff]
    %v158 = vld [vmem:[#allocation6 + $0x68] sm:$0xff]
    %v159 = vld [vmem:[#allocation6 + $0x70] sm:$0xff]
    %v160 = vld [vmem:[#allocation6 + $0x78] sm:$0xff]
    %161 = vmatprep.subr.mxu0 0.0
    %162 = vmatpush1.msra.mxu0 %v145
    %163 = vmatprep.subr.mxu0 0.0
    %164 = vmatpush1.msra.mxu0 %v146
    %165 = vmatprep.subr.mxu0 0.0
    %166 = vmatpush1.msra.mxu0 %v147
    %167 = vmatprep.subr.mxu0 0.0
    %168 = vmatpush1.msra.mxu0 %v148
    %169 = vmatprep.subr.mxu0 0.0
    %170 = vmatpush1.msra.mxu0 %v149
    %171 = vmatprep.subr.mxu0 0.0
    %172 = vmatpush1.msra.mxu0 %v150
    %173 = vmatprep.subr.mxu0 0.0
    %174 = vmatpush1.msra.mxu0 %v151
    %175 = vmatprep.subr.mxu0 0.0
    %176 = vmatpush1.msra.mxu0 %v152
    %177 = vmatprep.subr.mxu0 0.0
    %178 = vmatpush1.msra.mxu0 %v153
    %179 = vmatprep.subr.mxu0 0.0
    %180 = vmatpush1.msra.mxu0 %v154
    %181 = vmatprep.subr.mxu0 0.0
    %182 = vmatpush1.msra.mxu0 %v155
    %183 = vmatprep.subr.mxu0 0.0
    %184 = vmatpush1.msra.mxu0 %v156
    %185 = vmatprep.subr.mxu0 0.0
    %186 = vmatpush1.msra.mxu0 %v157
    %187 = vmatprep.subr.mxu0 0.0
    %188 = vmatpush1.msra.mxu0 %v158
    %189 = vmatprep.subr.mxu0 0.0
    %190 = vmatpush1.msra.mxu0 %v159
    %191 = vmatprep.subr.mxu0 0.0
    %192 = vmatpush1.msra.mxu0 %v160
    %193 = vmatprep.subr.mxu0 0.0
    %194 = vmatpush1.msra.mxu0 0.0
    %195 = vmatprep.subr.mxu0 0.0
    %196 = vmatpush1.msra.mxu0 0.0
    %197 = vmatprep.subr.mxu0 0.0
    %198 = vmatpush1.msra.mxu0 0.0
    %199 = vmatprep.subr.mxu0 0.0
    %200 = vmatpush1.msra.mxu0 0.0
    %201 = vmatprep.subr.mxu0 0.0
    %202 = vmatpush1.msra.mxu0 0.0
    %203 = vmatprep.subr.mxu0 0.0
    %204 = vmatpush1.msra.mxu0 0.0
    %205 = vmatprep.subr.mxu0 0.0
    %206 = vmatpush1.msra.mxu0 0.0
    %207 = vmatprep.subr.mxu0 0.0
    %208 = vmatpush1.msra.mxu0 0.0
    %209 = vmatprep.subr.mxu0 0.0
    %210 = vmatpush1.msra.mxu0 0.0
    %211 = vmatprep.subr.mxu0 0.0
    %212 = vmatpush1.msra.mxu0 0.0
    %213 = vmatprep.subr.mxu0 0.0
    %214 = vmatpush1.msra.mxu0 0.0
    %215 = vmatprep.subr.mxu0 0.0
    %216 = vmatpush1.msra.mxu0 0.0
    %217 = vmatprep.subr.mxu0 0.0
    %218 = vmatpush1.msra.mxu0 0.0
    %219 = vmatprep.subr.mxu0 0.0
    %220 = vmatpush1.msra.mxu0 0.0
    %221 = vmatprep.subr.mxu0 0.0
    %222 = vmatpush1.msra.mxu0 0.0
    %223 = vmatprep.subr.mxu0 0.0
    %224 = vmatpush1.msra.mxu0 0.0
    %225 = vmatprep.mubr.f32.mxu0 0.0
    %226 = vmatmul.mubr.f32.gmra.mrb[0].mxu0 %v143
    %v227 = vpop.f32.mrb[0].mxu0
    %v228 = vadd.f32 0.0, %v227
    %v229 = vpop.f32.mrb[0].mxu0
    %230 = vdwg.mxu0
    %v231 = vadd.f32 %v144, %v228
    %232 = vst [vmem:[#allocation2] sm:$0xff] %v231
    // Predicated region
    $region46: #{tpu_custom_call.1} parent=1 // pred_check
      %p233 = pneg %p77
    $region47: #{tpu_custom_call.1} parent=1 // pred_check_branch
      %235 = sbr.rel (%p233) target = $region49
    $region48: #{tpu_custom_call.1} parent=1 // pred_region
      %v236 = vld [vmem:[#allocation2] sm:$0xff]
      %v237 = vmul.f32 %v236, 0.125
      %v238 = vld [vmem:[#allocation8] sm:$0xff]
      %v239 = vld [vmem:[#allocation8 + $0x8] sm:$0xff]
      %v240 = vld [vmem:[#allocation8 + $0x10] sm:$0xff]
      %v241 = vld [vmem:[#allocation8 + $0x18] sm:$0xff]
      %v242 = vld [vmem:[#allocation8 + $0x20] sm:$0xff]
      %v243 = vld [vmem:[#allocation8 + $0x28] sm:$0xff]
      %v244 = vld [vmem:[#allocation8 + $0x30] sm:$0xff]
      %v245 = vld [vmem:[#allocation8 + $0x38] sm:$0xff]
      %v246 = vld [vmem:[#allocation8 + $0x40] sm:$0xff]
      %v247 = vld [vmem:[#allocation8 + $0x48] sm:$0xff]
      %v248 = vld [vmem:[#allocation8 + $0x50] sm:$0xff]
      %v249 = vld [vmem:[#allocation8 + $0x58] sm:$0xff]
      %v250 = vld [vmem:[#allocation8 + $0x60] sm:$0xff]
      %v251 = vld [vmem:[#allocation8 + $0x68] sm:$0xff]
      %v252 = vld [vmem:[#allocation8 + $0x70] sm:$0xff]
      %v253 = vld [vmem:[#allocation8 + $0x78] sm:$0xff]
      %v254 = vld [vmem:[%s3] sm:$0x1]
      %v256 = vlaneseq
      %v257 = vshrl.u32 %v256, 7
      %v258 = vsub.s32 0, %v257
      %v259 = vrot.slane %v254, %v258
      %261 = vmatprep.subr.mxu0 0.0
      %262 = vmatpush1.msra.mxu0 %v238
      %263 = vmatprep.subr.mxu0 0.0
      %264 = vmatpush1.msra.mxu0 %v239
      %265 = vmatprep.subr.mxu0 0.0
      %266 = vmatpush1.msra.mxu0 %v240
      %267 = vmatprep.subr.mxu0 0.0
      %268 = vmatpush1.msra.mxu0 %v241
      %269 = vmatprep.subr.mxu0 0.0
      %270 = vmatpush1.msra.mxu0 %v242
      %271 = vmatprep.subr.mxu0 0.0
      %272 = vmatpush1.msra.mxu0 %v243
      %273 = vmatprep.subr.mxu0 0.0
      %274 = vmatpush1.msra.mxu0 %v244
      %275 = vmatprep.subr.mxu0 0.0
      %276 = vmatpush1.msra.mxu0 %v245
      %277 = vmatprep.subr.mxu0 0.0
      %278 = vmatpush1.msra.mxu0 %v246
      %279 = vmatprep.subr.mxu0 0.0
      %280 = vmatpush1.msra.mxu0 %v247
      %281 = vmatprep.subr.mxu0 0.0
      %282 = vmatpush1.msra.mxu0 %v248
      %283 = vmatprep.subr.mxu0 0.0
      %284 = vmatpush1.msra.mxu0 %v249
      %285 = vmatprep.subr.mxu0 0.0
      %286 = vmatpush1.msra.mxu0 %v250
      %287 = vmatprep.subr.mxu0 0.0
      %288 = vmatpush1.msra.mxu0 %v251
      %289 = vmatprep.subr.mxu0 0.0
      %290 = vmatpush1.msra.mxu0 %v252
      %291 = vmatprep.subr.mxu0 0.0
      %292 = vmatpush1.msra.mxu0 %v253
      %293 = vmatprep.subr.mxu0 0.0
      %294 = vmatpush1.msra.mxu0 0.0
      %295 = vmatprep.subr.mxu0 0.0
      %296 = vmatpush1.msra.mxu0 0.0
      %297 = vmatprep.subr.mxu0 0.0
      %298 = vmatpush1.msra.mxu0 0.0
      %299 = vmatprep.subr.mxu0 0.0
      %300 = vmatpush1.msra.mxu0 0.0
      %301 = vmatprep.subr.mxu0 0.0
      %302 = vmatpush1.msra.mxu0 0.0
      %303 = vmatprep.subr.mxu0 0.0
      %304 = vmatpush1.msra.mxu0 0.0
      %305 = vmatprep.subr.mxu0 0.0
      %306 = vmatpush1.msra.mxu0 0.0
      %307 = vmatprep.subr.mxu0 0.0
      %308 = vmatpush1.msra.mxu0 0.0
      %309 = vmatprep.subr.mxu0 0.0
      %310 = vmatpush1.msra.mxu0 0.0
      %311 = vmatprep.subr.mxu0 0.0
      %312 = vmatpush1.msra.mxu0 0.0
      %313 = vmatprep.subr.mxu0 0.0
      %314 = vmatpush1.msra.mxu0 0.0
      %315 = vmatprep.subr.mxu0 0.0
      %316 = vmatpush1.msra.mxu0 0.0
      %317 = vmatprep.subr.mxu0 0.0
      %318 = vmatpush1.msra.mxu0 0.0
      %319 = vmatprep.subr.mxu0 0.0
      %320 = vmatpush1.msra.mxu0 0.0
      %321 = vmatprep.subr.mxu0 0.0
      %322 = vmatpush1.msra.mxu0 0.0
      %323 = vmatprep.subr.mxu0 0.0
      %324 = vmatpush1.msra.mxu0 0.0
      %325 = vmatprep.mubr.f32.mxu0 0.0
      %326 = vmatmul.mubr.f32.gmra.mrb[0].mxu0 %v237
      %v327 = vpop.f32.mrb[0].mxu0
      %v328 = vadd.f32 %v259, %v327
      %v329 = vpop.f32.mrb[0].mxu0
      %330 = vdwg.mxu0
      %v331 = vmax.f32 %v328, 0.0
      %v332 = vld [vmem:[#allocation9] sm:$0xff]
      %v333 = vld [vmem:[#allocation9 + $0x8] sm:$0xff]
      %v334 = vld [vmem:[#allocation9 + $0x10] sm:$0xff]
      %v335 = vld [vmem:[#allocation9 + $0x18] sm:$0xff]
      %v336 = vld [vmem:[#allocation9 + $0x20] sm:$0xff]
      %v337 = vld [vmem:[#allocation9 + $0x28] sm:$0xff]
      %v338 = vld [vmem:[#allocation9 + $0x30] sm:$0xff]
      %v339 = vld [vmem:[#allocation9 + $0x38] sm:$0xff]
      %v340 = vld [vmem:[#allocation9 + $0x40] sm:$0xff]
      %v341 = vld [vmem:[#allocation9 + $0x48] sm:$0xff]
      %v342 = vld [vmem:[#allocation9 + $0x50] sm:$0xff]
      %v343 = vld [vmem:[#allocation9 + $0x58] sm:$0xff]
      %v344 = vld [vmem:[#allocation9 + $0x60] sm:$0xff]
      %v345 = vld [vmem:[#allocation9 + $0x68] sm:$0xff]
      %v346 = vld [vmem:[#allocation9 + $0x70] sm:$0xff]
      %v347 = vld [vmem:[#allocation9 + $0x78] sm:$0xff]
      %v348 = vld [vmem:[%s5] sm:$0x1]
      %v350 = vlaneseq
      %v351 = vshrl.u32 %v350, 7
      %v352 = vsub.s32 0, %v351
      %v353 = vrot.slane %v348, %v352
      %355 = vmatprep.subr.mxu0 0.0
      %356 = vmatpush1.msra.mxu0 %v332
      %357 = vmatprep.subr.mxu0 0.0
      %358 = vmatpush1.msra.mxu0 %v333
      %359 = vmatprep.subr.mxu0 0.0
      %360 = vmatpush1.msra.mxu0 %v334
      %361 = vmatprep.subr.mxu0 0.0
      %362 = vmatpush1.msra.mxu0 %v335
      %363 = vmatprep.subr.mxu0 0.0
      %364 = vmatpush1.msra.mxu0 %v336
      %365 = vmatprep.subr.mxu0 0.0
      %366 = vmatpush1.msra.mxu0 %v337
      %367 = vmatprep.subr.mxu0 0.0
      %368 = vmatpush1.msra.mxu0 %v338
      %369 = vmatprep.subr.mxu0 0.0
      %370 = vmatpush1.msra.mxu0 %v339
      %371 = vmatprep.subr.mxu0 0.0
      %372 = vmatpush1.msra.mxu0 %v340
      %373 = vmatprep.subr.mxu0 0.0
      %374 = vmatpush1.msra.mxu0 %v341
      %375 = vmatprep.subr.mxu0 0.0
      %376 = vmatpush1.msra.mxu0 %v342
      %377 = vmatprep.subr.mxu0 0.0
      %378 = vmatpush1.msra.mxu0 %v343
      %379 = vmatprep.subr.mxu0 0.0
      %380 = vmatpush1.msra.mxu0 %v344
      %381 = vmatprep.subr.mxu0 0.0
      %382 = vmatpush1.msra.mxu0 %v345
      %383 = vmatprep.subr.mxu0 0.0
      %384 = vmatpush1.msra.mxu0 %v346
      %385 = vmatprep.subr.mxu0 0.0
      %386 = vmatpush1.msra.mxu0 %v347
      %387 = vmatprep.subr.mxu0 0.0
      %388 = vmatpush1.msra.mxu0 0.0
      %389 = vmatprep.subr.mxu0 0.0
      %390 = vmatpush1.msra.mxu0 0.0
      %391 = vmatprep.subr.mxu0 0.0
      %392 = vmatpush1.msra.mxu0 0.0
      %393 = vmatprep.subr.mxu0 0.0
      %394 = vmatpush1.msra.mxu0 0.0
      %395 = vmatprep.subr.mxu0 0.0
      %396 = vmatpush1.msra.mxu0 0.0
      %397 = vmatprep.subr.mxu0 0.0
      %398 = vmatpush1.msra.mxu0 0.0
      %399 = vmatprep.subr.mxu0 0.0
      %400 = vmatpush1.msra.mxu0 0.0
      %401 = vmatprep.subr.mxu0 0.0
      %402 = vmatpush1.msra.mxu0 0.0
      %403 = vmatprep.subr.mxu0 0.0
      %404 = vmatpush1.msra.mxu0 0.0
      %405 = vmatprep.subr.mxu0 0.0
      %406 = vmatpush1.msra.mxu0 0.0
      %407 = vmatprep.subr.mxu0 0.0
      %408 = vmatpush1.msra.mxu0 0.0
      %409 = vmatprep.subr.mxu0 0.0
      %410 = vmatpush1.msra.mxu0 0.0
      %411 = vmatprep.subr.mxu0 0.0
      %412 = vmatpush1.msra.mxu0 0.0
      %413 = vmatprep.subr.mxu0 0.0
      %414 = vmatpush1.msra.mxu0 0.0
      %415 = vmatprep.subr.mxu0 0.0
      %416 = vmatpush1.msra.mxu0 0.0
      %417 = vmatprep.subr.mxu0 0.0
      %418 = vmatpush1.msra.mxu0 0.0
      %419 = vmatprep.mubr.f32.mxu0 0.0
      %420 = vmatmul.mubr.f32.gmra.mrb[0].mxu0 %v331
      %v421 = vpop.f32.mrb[0].mxu0
      %v422 = vadd.f32 %v353, %v421
      %v423 = vpop.f32.mrb[0].mxu0
      %424 = vdwg.mxu0
      %425 = vst [vmem:[#allocation11] sm:$0xff] %v422
    $region49: #{tpu_custom_call.1} parent=1 // pred_fallthru
      _
    // Predicated region
    $region50: #{tpu_custom_call.1} parent=1 // pred_check
      _
    $region51: #{tpu_custom_call.1} parent=1 // pred_check_branch
      %427 = sbr.rel (0) target = $region53
    $region52: #{tpu_custom_call.1} parent=1 // pred_region
      %s429 = ssub.s32 128, 128
      %430 = vsyncadd [#allocation5], %s429
      %s432 = sshll.u32 [#allocation11], 4
      %s433 = int_to_ptr.vmem [resolvable:$true] %s432
      %435 = dma.vmem_to_hbm [thread:$0]  %s433, 128, %s6, [#allocation5]
    $region53: #{tpu_custom_call.1} parent=1 // pred_fallthru
      _
    // Predicated region
    $region54: #{tpu_custom_call.1} parent=1 // pred_check
      _
    $region55: #{tpu_custom_call.1} parent=1 // pred_check_branch
      %437 = sbr.rel (0) target = $region57
    $region56: #{tpu_custom_call.1} parent=1 // pred_region
      %438 = dma.done [#allocation5], 128
    $region57: #{tpu_custom_call.1} parent=1 // pred_fallthru
      _
    %439 = vsyncpa [#allocation4], 1
    %440 = vsyncpa [#allocation7], 1
    %441 = vsyncpa [#allocation10], 1
    %442 = vsyncpa [#allocation5], 1

</llo_original>
